<compile_context>
chip_gen: v6e
topology: v6e:2x2x1
jax: 0.10.0
libtpu: 0.0.40
codegen_flags: <defaults>
</compile_context>

<pallas_src>
import jax
import jax.numpy as jnp
import numpy as np
from jax.experimental import pallas as pl
from jax.experimental.pallas import tpu as pltpu

# ----------------------- configuration -----------------------
LANES = 512           # lane-dense last dim (multiple of 128 -> unmasked vst)
MAX_TILE_ROWS = 512   # 512 rows x 512 lanes x 4 B = 1 MiB per grid step

F32_MAX = float(jnp.finfo(jnp.float32).max)
F32_LOWEST = float(jnp.finfo(jnp.float32).min)   # most-negative finite


def _round_up(x: int, m: int) -> int:
    return ((x + m - 1) // m) * m


# ----------------------- Pallas kernel -----------------------
def _momentum_activation_kernel(s_ref, x_ref, o_ref):
    # momentum_sensitivity: scalar parameter held in SMEM.
    s = s_ref[0]

    x = x_ref[...]
    out = x * (1.0 + s * jnp.tanh(x))          # tanh -> EUP slot, muls -> VPU

    # torch.nan_to_num semantics, fused: NaN -> 0, +/-inf -> finite extremes.
    out = jnp.where(jnp.isnan(out), 0.0, jnp.clip(out, F32_LOWEST, F32_MAX))

    o_ref[...] = out


# ----------------------- wrapper -----------------------
def momentum_activation(x, momentum_sensitivity):
    """Elementwise MomentumActivation over an arbitrarily shaped f32 tensor."""
    orig_shape = x.shape
    orig_dtype = x.dtype
    n = int(np.prod(orig_shape)) if orig_shape else 1

    # Flatten to a lane-dense 2D slab (rows x LANES). Padding is zeros, which
    # the activation maps to zeros, and is sliced off afterwards.
    rows = pl.cdiv(n, LANES)

    # Tile-size policy:
    #  * tiny problems -> single (or few) steps, minimum 8 sublanes
    #  * large problems -> up to 1 MiB tiles, but keep >= 2 grid steps so both
    #    v7x TensorCores can be used via dimension_semantics=("parallel",).
    if rows <= 16:
        tile_rows = _round_up(rows, 8)
    else:
        tile_rows = min(MAX_TILE_ROWS, _round_up(pl.cdiv(rows, 2), 8))
    grid = pl.cdiv(rows, tile_rows)
    rows_padded = grid * tile_rows

    x_flat = jnp.ravel(x).astype(jnp.float32)
    pad = rows_padded * LANES - n
    if pad:
        x_flat = jnp.pad(x_flat, (0, pad))
    x2d = x_flat.reshape(rows_padded, LANES)

    # Scalar parameter as a (1,) f32 array (SMEM, no vector DMA).
    s = jnp.asarray(momentum_sensitivity, jnp.float32).reshape((1,))

    out2d = pl.pallas_call(
        _momentum_activation_kernel,
        out_shape=jax.ShapeDtypeStruct((rows_padded, LANES), jnp.float32),
        grid=(grid,),
        in_specs=[
            # scalar parameter: whole (1,) array in SMEM
            pl.BlockSpec(memory_space=pltpu.MemorySpace.SMEM),
            # activations: lane-dense (tile_rows, LANES) tiles
            pl.BlockSpec((tile_rows, LANES), lambda i: (i, 0)),
        ],
        out_specs=pl.BlockSpec((tile_rows, LANES), lambda i: (i, 0)),
        compiler_params=pltpu.CompilerParams(
            dimension_semantics=("parallel",)),
    )(s, x2d)

    out = out2d.reshape(-1)[:n].reshape(orig_shape)
    return out.astype(orig_dtype)


# ----------------------- pure-JAX reference -----------------------
def reference(x, momentum_sensitivity):
    s = jnp.asarray(momentum_sensitivity, jnp.float32).reshape(())
    out = x * (1.0 + s * jnp.tanh(x))
    return jnp.nan_to_num(out)   # defaults match torch.nan_to_num defaults


# ----------------------- main -----------------------
if __name__ == "__main__":
    key = jax.random.PRNGKey(0)

    # Small 4D input (batch=2, channels=4, spatial=16x16); the module is a
    # pure elementwise activation so any shape is valid.
    x = jax.random.normal(key, (2, 4, 16, 16), jnp.float32) * 3.0
    # Inject non-finite values so the nan_to_num path is exercised.
    x = x.at[0, 0, 0, 0].set(jnp.inf)
    x = x.at[0, 1, 1, 1].set(-jnp.inf)
    x = x.at[1, 2, 2, 2].set(jnp.nan)

    # nn.Parameter(torch.tensor(1.0)) -> default momentum_sensitivity = 1.0
    momentum_sensitivity = jnp.float32(1.0)

    out = jax.block_until_ready(momentum_activation(x, momentum_sensitivity))
    ref = jax.block_until_ready(reference(x, momentum_sensitivity))

    assert out.shape == x.shape
    assert np.allclose(np.asarray(out), np.asarray(ref), rtol=1e-6, atol=1e-6)

    print("KERNEL_OK")
</pallas_src>

<mosaic_0001>
module attributes {stable_mosaic.version = 11 : i64} {
  func.func @_momentum_activation_kernel(%arg0: i32, %arg1: memref<1xf32, #tpu.memory_space<smem>>, %arg2: memref<8x512xf32, #tpu.memory_space<vmem>>, %arg3: memref<8x512xf32, #tpu.memory_space<vmem>>) attributes {dimension_semantics = [#tpu.dimension_semantics<parallel>], iteration_bounds = array<i64: 1>, scalar_prefetch = 0 : i64, scratch_operands = 0 : i64, tpu.core_type = #tpu.core_type<tc>, window_params = [{transform_indices = @transform_0, window_bounds = array<i64: 1>}, {transform_indices = @transform_1, window_bounds = array<i64: 8, 512>}, {transform_indices = @transform_2, window_bounds = array<i64: 8, 512>}]} {
    %c0 = arith.constant 0 : index
    %0 = memref.load %arg1[%c0] : memref<1xf32, #tpu.memory_space<smem>>
    %c0_0 = arith.constant 0 : index
    %c0_1 = arith.constant 0 : index
    %1 = vector.load %arg2[%c0_0, %c0_1] : memref<8x512xf32, #tpu.memory_space<vmem>>, vector<8x512xf32>
    %2 = math.tanh %1 : vector<8x512xf32>
    %3 = vector.broadcast %0 : f32 to vector<8x512xf32>
    %4 = arith.mulf %3, %2 : vector<8x512xf32>
    %cst = arith.constant 1.000000e+00 : f32
    %5 = vector.broadcast %cst : f32 to vector<8x512xf32>
    %6 = arith.addf %5, %4 : vector<8x512xf32>
    %7 = arith.mulf %1, %6 : vector<8x512xf32>
    %8 = arith.cmpf one, %7, %7 : vector<8x512xf32>
    %cst_2 = arith.constant -3.40282347E+38 : f32
    %cst_3 = arith.constant 3.40282347E+38 : f32
    %9 = vector.broadcast %cst_2 : f32 to vector<8x512xf32>
    %10 = arith.maximumf %9, %7 : vector<8x512xf32>
    %11 = vector.broadcast %cst_3 : f32 to vector<8x512xf32>
    %12 = arith.minimumf %11, %10 : vector<8x512xf32>
    %cst_4 = arith.constant 0.000000e+00 : f32
    %13 = vector.broadcast %cst_4 : f32 to vector<8x512xf32>
    %14 = arith.select %8, %13, %12 : vector<8x512xi1>, vector<8x512xf32>
    %c0_5 = arith.constant 0 : index
    %c0_6 = arith.constant 0 : index
    %15 = vector.load %arg3[%c0_5, %c0_6] : memref<8x512xf32, #tpu.memory_space<vmem>>, vector<8x512xf32>
    tpu.vector_store %arg3[%c0_5, %c0_6], %14 {strides = array<i32>} : memref<8x512xf32, #tpu.memory_space<vmem>>, vector<8x512xf32>,
    return
  }
  func.func @transform_0(%arg0: i32) -> i32 {
    %c0_i32 = arith.constant 0 : i32
    %c0_i32_0 = arith.constant 0 : i32
    return %c0_i32 : i32
  }
  func.func @transform_1(%arg0: i32) -> (i32, i32) {
    %c0_i32 = arith.constant 0 : i32
    %c0_i32_0 = arith.constant 0 : i32
    return %arg0, %c0_i32 : i32, i32
  }
  func.func @transform_2(%arg0: i32) -> (i32, i32) {
    %c0_i32 = arith.constant 0 : i32
    %c0_i32_0 = arith.constant 0 : i32
    return %arg0, %c0_i32 : i32, i32
  }
}

</mosaic_0001>

<llo_original>
// kernel: tpu_custom_call.1
$region0: #{tpu_custom_call.1}
  #allocation0 [shape = 'u32[]', space=smem, size = 0x4, offset = 0x4, fixed_abs, tag = 'smem constant byte address 0x4 - core index']
  #allocation1 [shape = 'u32[144,128]{1,0:T(1,128)}', space=vmem, size = 0x12000, scoped, tag = 'internal scratch']
  #allocation2 [shape = 'f32[1]{0:T(128)S(6)}', space=smem, size = 0x200, scoped, tag = 'scoped memory for tpu_custom_call.1']
  %s0 = inlined_call_operand.<no memory space> [shape: f32[1], index: 0, kind: input, shape index: {}]
  %s1 = inlined_call_operand.hbm [shape: f32[8,512], index: 1, kind: input, shape index: {}]
  %s2 = inlined_call_operand.hbm [shape: f32[8,512], index: 2, kind: output, shape index: {}]
  %s3 = sld [smem:[#allocation0]]
  $region22: #{tpu_custom_call.1} parent=0
    _
  %s5 = ssub.s32 1, %s3
  %s6 = scalar_select 0, %s5, %s3
  %7 = sst [smem:[#allocation2]] %s0
  $region1: #{tpu_custom_call.1} parent=0
    #allocation3 [shape = 'u8[16384]{0}', space=vmem, size = 0x4000, scoped, tag = 'input window, operand 1, single buffered']
    #allocation4 [shape = 's32[1]{0}', space=sflag, size = 0x4, scoped, tag = 'scoped memory for tpu_custom_call.1']
    #allocation5 [shape = 's32[1]{0}', space=sflag, size = 0x4, scoped, tag = 'scoped memory for tpu_custom_call.1']
    #allocation6 [shape = 'u8[16384]{0}', space=vmem, size = 0x4000, scoped, tag = 'output window, operand 0, single buffered']
    %8 = vsyncpa [#allocation4], 0
    %9 = vsyncpa [#allocation5], 0
    // Predicated region
    $region2: #{tpu_custom_call.1} parent=1 // pred_check
      _
    $region3: #{tpu_custom_call.1} parent=1 // pred_check_branch
      %11 = sbr.rel (0) target = $region5
    $region4: #{tpu_custom_call.1} parent=1 // pred_region
      _
    $region5: #{tpu_custom_call.1} parent=1 // pred_fallthru
      _
    // Predicated region
    $region6: #{tpu_custom_call.1} parent=1 // pred_check
      _
    $region7: #{tpu_custom_call.1} parent=1 // pred_check_branch
      %13 = sbr.rel (0) target = $region9
    $region8: #{tpu_custom_call.1} parent=1 // pred_region
      %s15 = ssub.s32 512, 512
      %16 = vsyncadd [#allocation4], %s15
      %s18 = sshll.u32 [#allocation3], 4
      %s19 = int_to_ptr.vmem [resolvable:$true] %s18
      %21 = dma.hbm_to_vmem [thread:$0]  %s1, 512, %s19, [#allocation4]
    $region9: #{tpu_custom_call.1} parent=1 // pred_fallthru
      _
    // Predicated region
    $region10: #{tpu_custom_call.1} parent=1 // pred_check
      _
    $region11: #{tpu_custom_call.1} parent=1 // pred_check_branch
      %23 = sbr.rel (0) target = $region13
    $region12: #{tpu_custom_call.1} parent=1 // pred_region
      %24 = dma.done [#allocation4], 512
    $region13: #{tpu_custom_call.1} parent=1 // pred_fallthru
      _
    %s25 = sld [smem:[#allocation2]]
    %v26 = vld [vmem:[#allocation3] sm:$0xff]
    %v27 = vld [vmem:[#allocation3 + $0x8] sm:$0xff]
    %v28 = vld [vmem:[#allocation3 + $0x10] sm:$0xff]
    %v29 = vld [vmem:[#allocation3 + $0x18] sm:$0xff]
    %v30 = vtanh.pop %v26
    %v31 = vtanh.pop %v27
    %v32 = vtanh.pop %v28
    %v33 = vtanh.pop %v29
    %v34 = vstv %s25
    %v35 = vmul.f32 %v34, %v30
    %v36 = vmul.f32 %v34, %v31
    %v37 = vmul.f32 %v34, %v32
    %v38 = vmul.f32 %v34, %v33
    %v39 = vadd.f32 %v35, 1.0
    %v40 = vadd.f32 %v36, 1.0
    %v41 = vadd.f32 %v37, 1.0
    %v42 = vadd.f32 %v38, 1.0
    %v43 = vmul.f32 %v26, %v39
    %v44 = vmul.f32 %v27, %v40
    %v45 = vmul.f32 %v28, %v41
    %v46 = vmul.f32 %v29, %v42
    %vm47 = vcmp.ne.f32.partialorder %v43, %v43
    %vm48 = vcmp.ne.f32.partialorder %v44, %v44
    %vm49 = vcmp.ne.f32.partialorder %v45, %v45
    %vm50 = vcmp.ne.f32.partialorder %v46, %v46
    %v51 = vmax.f32 %v43, -3.4028235e+38
    %v52 = vmax.f32 %v44, -3.4028235e+38
    %v53 = vmax.f32 %v45, -3.4028235e+38
    %v54 = vmax.f32 %v46, -3.4028235e+38
    %v55 = vmin.f32 %v51, 3.4028235e+38
    %v56 = vmin.f32 %v52, 3.4028235e+38
    %v57 = vmin.f32 %v53, 3.4028235e+38
    %v58 = vmin.f32 %v54, 3.4028235e+38
    %v59 = vsel %vm47, 0.0, %v55
    %v60 = vsel %vm48, 0.0, %v56
    %v61 = vsel %vm49, 0.0, %v57
    %v62 = vsel %vm50, 0.0, %v58
    %63 = vst [vmem:[#allocation6] sm:$0xff] %v59
    %64 = vst [vmem:[#allocation6 + $0x8] sm:$0xff] %v60
    %65 = vst [vmem:[#allocation6 + $0x10] sm:$0xff] %v61
    %66 = vst [vmem:[#allocation6 + $0x18] sm:$0xff] %v62
    // Predicated region
    $region14: #{tpu_custom_call.1} parent=1 // pred_check
      _
    $region15: #{tpu_custom_call.1} parent=1 // pred_check_branch
      %68 = sbr.rel (0) target = $region17
    $region16: #{tpu_custom_call.1} parent=1 // pred_region
      %s70 = ssub.s32 512, 512
      %71 = vsyncadd [#allocation5], %s70
      %s73 = sshll.u32 [#allocation6], 4
      %s74 = int_to_ptr.vmem [resolvable:$true] %s73
      %76 = dma.vmem_to_hbm [thread:$0]  %s74, 512, %s2, [#allocation5]
    $region17: #{tpu_custom_call.1} parent=1 // pred_fallthru
      _
    // Predicated region
    $region18: #{tpu_custom_call.1} parent=1 // pred_check
      _
    $region19: #{tpu_custom_call.1} parent=1 // pred_check_branch
      %78 = sbr.rel (0) target = $region21
    $region20: #{tpu_custom_call.1} parent=1 // pred_region
      %79 = dma.done [#allocation5], 512
    $region21: #{tpu_custom_call.1} parent=1 // pred_fallthru
      _
    %80 = vsyncpa [#allocation4], 1
    %81 = vsyncpa [#allocation5], 1

</llo_original>
